<compile_context>
chip_gen: v5e
topology: v5e:2x2
jax: 0.10.0
libtpu: 0.0.40
codegen_flags: <defaults>
</compile_context>

<pallas_src>
import functools

import jax
import jax.numpy as jnp
from jax import lax
from jax.experimental import pallas as pl
from jax.experimental.pallas import tpu as pltpu


# ----------------------------------------------------------------------------
# Tiled linear:  y = x @ w (+ bias)
# ----------------------------------------------------------------------------
def _matmul_kernel(x_ref, w_ref, o_ref, acc_ref):
    @pl.when(pl.program_id(2) == 0)
    def _():
        acc_ref[...] = jnp.zeros_like(acc_ref)

    acc_ref[...] += jnp.dot(x_ref[...], w_ref[...],
                            preferred_element_type=jnp.float32)

    @pl.when(pl.program_id(2) == pl.num_programs(2) - 1)
    def _():
        o_ref[...] = acc_ref[...].astype(o_ref.dtype)


def _matmul_bias_kernel(x_ref, w_ref, b_ref, o_ref, acc_ref):
    @pl.when(pl.program_id(2) == 0)
    def _():
        acc_ref[...] = jnp.zeros_like(acc_ref)

    acc_ref[...] += jnp.dot(x_ref[...], w_ref[...],
                            preferred_element_type=jnp.float32)

    @pl.when(pl.program_id(2) == pl.num_programs(2) - 1)
    def _():
        # Bias added exactly once, on the final K step.
        o_ref[...] = (acc_ref[...] + b_ref[...].astype(jnp.float32)
                      ).astype(o_ref.dtype)


def _pick_tile(dim, target, align):
    """Largest tile <= target that divides `dim` and is a multiple of `align`
    (or the full dim, which always satisfies the (8,128) rule)."""
    if dim <= target:
        return dim
    t = (target // align) * align
    while t >= align:
        if dim % t == 0:
            return t
        t -= align
    return dim


def linear(x, w, bias=None, *, tm_target=256, tk_target=512, tn_target=256):
    """x: (M, K), w: (K, N), bias: (N,) or None -> (M, N)."""
    M, K = x.shape
    K2, Nout = w.shape
    assert K == K2

    tm = _pick_tile(M, tm_target, 8)
    tk = _pick_tile(K, tk_target, 128)
    tn = _pick_tile(Nout, tn_target, 128)
    grid = (M // tm, Nout // tn, K // tk)

    x_spec = pl.BlockSpec((tm, tk), lambda i, j, k: (i, k))
    w_spec = pl.BlockSpec((tk, tn), lambda i, j, k: (k, j))
    o_spec = pl.BlockSpec((tm, tn), lambda i, j, k: (i, j))

    if bias is None:
        kernel = _matmul_kernel
        in_specs = [x_spec, w_spec]
        args = (x, w)
    else:
        kernel = _matmul_bias_kernel
        b_spec = pl.BlockSpec((1, tn), lambda i, j, k: (0, j))
        in_specs = [x_spec, w_spec, b_spec]
        args = (x, w, bias.reshape(1, Nout))

    return pl.pallas_call(
        kernel,
        out_shape=jax.ShapeDtypeStruct((M, Nout), x.dtype),
        grid_spec=pltpu.PrefetchScalarGridSpec(
            num_scalar_prefetch=0,
            grid=grid,
            in_specs=in_specs,
            out_specs=o_spec,
            scratch_shapes=[pltpu.VMEM((tm, tn), jnp.float32)],
        ),
        compiler_params=pltpu.CompilerParams(
            dimension_semantics=("parallel", "parallel", "arbitrary")),
    )(*args)


# ----------------------------------------------------------------------------
# Fused multi-head attention over the packed qkv tensor.
#   qkv block: (1, N, 3*inner)  ->  out block: (1, N, inner)
#   All heads handled inside one grid step (grid over batch only).
# ----------------------------------------------------------------------------
def _fused_attn_kernel(qkv_ref, o_ref, *, heads, dim_head, scale):
    inner = heads * dim_head
    qkv = qkv_ref[0]                                   # (N, 3*inner)

    for h in range(heads):                             # static unroll
        lo = h * dim_head
        # Pre-scale q: N*Dh multiplies instead of N*N on the score matrix.
        q = qkv[:, lo:lo + dim_head].astype(jnp.float32) * scale
        k = qkv[:, inner + lo:inner + lo + dim_head].astype(jnp.float32)
        v = qkv[:, 2 * inner + lo:2 * inner + lo + dim_head]

        # q @ k^T without transposing k (contract last dims on the MXU).
        s = lax.dot_general(q, k,
                            dimension_numbers=(((1,), (1,)), ((), ())),
                            preferred_element_type=jnp.float32)   # (N, N)

        # Numerically-stable softmax, denom via EUP approx reciprocal.
        m = jnp.max(s, axis=-1, keepdims=True)
        e = jnp.exp(s - m)
        denom = jnp.sum(e, axis=-1, keepdims=True)
        attn = e * pl.reciprocal(denom, approx=True)

        out_h = jnp.dot(attn.astype(v.dtype), v,
                        preferred_element_type=jnp.float32)        # (N, Dh)
        # Write directly into the packed 'b n (h d)' output layout.
        o_ref[0, :, lo:lo + dim_head] = out_h.astype(o_ref.dtype)


def fused_attention(qkv, heads, dim_head, scale):
    """qkv: (B, N, 3*inner) -> (B, N, inner)."""
    B, N, three_inner = qkv.shape
    inner = heads * dim_head
    assert three_inner == 3 * inner

    kernel = functools.partial(_fused_attn_kernel, heads=heads,
                               dim_head=dim_head, scale=scale)
    return pl.pallas_call(
        kernel,
        out_shape=jax.ShapeDtypeStruct((B, N, inner), qkv.dtype),
        grid_spec=pltpu.PrefetchScalarGridSpec(
            num_scalar_prefetch=0,
            grid=(B,),
            in_specs=[pl.BlockSpec((1, N, three_inner), lambda b: (b, 0, 0))],
            out_specs=pl.BlockSpec((1, N, inner), lambda b: (b, 0, 0)),
        ),
        compiler_params=pltpu.CompilerParams(
            dimension_semantics=("parallel",)),
    )(qkv)


# ----------------------------------------------------------------------------
# Full module forward
# ----------------------------------------------------------------------------
def attention_forward(x, params, heads):
    B, N, D = x.shape
    w_qkv = params["w_qkv"]          # (D, 3*inner)  (already (in, out))
    w_out = params["w_out"]          # (inner, D)
    b_out = params["b_out"]          # (D,)
    inner = w_out.shape[0]
    dim_head = inner // heads
    scale = dim_head ** (-0.5)

    # QKV projection (no bias) -> packed (B, N, 3*inner)
    qkv = linear(x.reshape(B * N, D), w_qkv).reshape(B, N, 3 * inner)

    # Fused per-batch attention over all heads; writes (B, N, inner) directly.
    out = fused_attention(qkv, heads, dim_head, scale)

    # Output projection (with bias); Dropout(p=0) is identity.
    y = linear(out.reshape(B * N, inner), w_out, b_out)
    return y.reshape(B, N, D)


# Pure-JAX reference for verification
def attention_forward_ref(x, params, heads):
    B, N, D = x.shape
    inner = params["w_out"].shape[0]
    dim_head = inner // heads
    scale = dim_head ** (-0.5)
    qkv = x @ params["w_qkv"]
    q, k, v = jnp.split(qkv, 3, axis=-1)
    to_heads = lambda t: t.reshape(B, N, heads, dim_head).transpose(0, 2, 1, 3)
    q, k, v = map(to_heads, (q, k, v))
    dots = jnp.einsum("bhid,bhjd->bhij", q, k) * scale
    attn = jax.nn.softmax(dots, axis=-1)
    out = jnp.einsum("bhij,bhjd->bhid", attn, v)
    out = out.transpose(0, 2, 1, 3).reshape(B, N, inner)
    return out @ params["w_out"] + params["b_out"]


if __name__ == "__main__":
    # Small, module-consistent shapes
    B, N, D = 2, 8, 32
    heads, dim_head = 2, 16
    inner = heads * dim_head

    key = jax.random.PRNGKey(0)
    kx, kq, kw, kb = jax.random.split(key, 4)

    x = jax.random.normal(kx, (B, N, D), dtype=jnp.float32)
    params = {
        # stored already transposed relative to PyTorch (in, out) so y = x @ w
        "w_qkv": jax.random.normal(kq, (D, 3 * inner), dtype=jnp.float32) * 0.05,
        "w_out": jax.random.normal(kw, (inner, D), dtype=jnp.float32) * 0.05,
        "b_out": jax.random.normal(kb, (D,), dtype=jnp.float32) * 0.05,
    }

    y = attention_forward(x, params, heads)
    y = jax.block_until_ready(y)

    y_ref = attention_forward_ref(x, params, heads)
    assert y.shape == (B, N, D)
    # approx reciprocal in the softmax denominator -> slightly looser tolerance
    assert jnp.allclose(y, y_ref, atol=2e-3, rtol=2e-3), "mismatch vs reference"

    print("KERNEL_OK")
</pallas_src>

<mosaic_0001>
module attributes {stable_mosaic.version = 11 : i64} {
  func.func @_matmul_kernel(%arg0: i32, %arg1: i32, %arg2: i32, %arg3: memref<16x32xf32, #tpu.memory_space<vmem>>, %arg4: memref<32x96xf32, #tpu.memory_space<vmem>>, %arg5: memref<16x96xf32, #tpu.memory_space<vmem>>, %arg6: memref<16x96xf32, #tpu.memory_space<vmem>>) attributes {dimension_semantics = [#tpu.dimension_semantics<parallel>, #tpu.dimension_semantics<parallel>, #tpu.dimension_semantics<arbitrary>], iteration_bounds = array<i64: 1, 1, 1>, scalar_prefetch = 0 : i64, scratch_operands = 1 : i64, tpu.core_type = #tpu.core_type<tc>, window_params = [{transform_indices = @transform_0, window_bounds = array<i64: 16, 32>}, {transform_indices = @transform_1, window_bounds = array<i64: 32, 96>}, {transform_indices = @transform_2, window_bounds = array<i64: 16, 96>}]} {
    %c0_i32 = arith.constant 0 : i32
    %0 = arith.cmpi eq, %arg2, %c0_i32 : i32
    %1 = arith.extui %0 : i1 to i32
    %c0_i32_0 = arith.constant 0 : i32
    %2 = arith.cmpi ne, %1, %c0_i32_0 : i32
    scf.if %2 {
      %cst_10 = arith.constant 0.000000e+00 : f32
      %12 = vector.broadcast %cst_10 : f32 to vector<16x96xf32>
      %c0_11 = arith.constant 0 : index
      %c0_12 = arith.constant 0 : index
      %13 = vector.load %arg6[%c0_11, %c0_12] : memref<16x96xf32, #tpu.memory_space<vmem>>, vector<16x96xf32>
      tpu.vector_store %arg6[%c0_11, %c0_12], %12 {strides = array<i32>} : memref<16x96xf32, #tpu.memory_space<vmem>>, vector<16x96xf32>,
    } else {
    }
    %c0 = arith.constant 0 : index
    %c0_1 = arith.constant 0 : index
    %3 = vector.load %arg6[%c0, %c0_1] : memref<16x96xf32, #tpu.memory_space<vmem>>, vector<16x96xf32>
    %c0_2 = arith.constant 0 : index
    %c0_3 = arith.constant 0 : index
    %4 = vector.load %arg3[%c0_2, %c0_3] : memref<16x32xf32, #tpu.memory_space<vmem>>, vector<16x32xf32>
    %c0_4 = arith.constant 0 : index
    %c0_5 = arith.constant 0 : index
    %5 = vector.load %arg4[%c0_4, %c0_5] : memref<32x96xf32, #tpu.memory_space<vmem>>, vector<32x96xf32>
    %cst = arith.constant dense<0.000000e+00> : vector<16x96xf32>
    %6 = tpu.matmul %4, %5, %cst {dimension_numbers = #tpu.dot_dimension_numbers<[1], [0], [0], [1], [0, 0, 1, 1], [], []>} : vector<16x32xf32>, vector<32x96xf32>, vector<16x96xf32> -> vector<16x96xf32>
    %7 = arith.addf %3, %6 : vector<16x96xf32>
    %c0_6 = arith.constant 0 : index
    %c0_7 = arith.constant 0 : index
    %8 = vector.load %arg6[%c0_6, %c0_7] : memref<16x96xf32, #tpu.memory_space<vmem>>, vector<16x96xf32>
    tpu.vector_store %arg6[%c0_6, %c0_7], %7 {strides = array<i32>} : memref<16x96xf32, #tpu.memory_space<vmem>>, vector<16x96xf32>,
    %c0_i32_8 = arith.constant 0 : i32
    %9 = arith.cmpi eq, %arg2, %c0_i32_8 : i32
    %10 = arith.extui %9 : i1 to i32
    %c0_i32_9 = arith.constant 0 : i32
    %11 = arith.cmpi ne, %10, %c0_i32_9 : i32
    scf.if %11 {
      %c0_10 = arith.constant 0 : index
      %c0_11 = arith.constant 0 : index
      %12 = vector.load %arg6[%c0_10, %c0_11] : memref<16x96xf32, #tpu.memory_space<vmem>>, vector<16x96xf32>
      %c0_12 = arith.constant 0 : index
      %c0_13 = arith.constant 0 : index
      %13 = vector.load %arg5[%c0_12, %c0_13] : memref<16x96xf32, #tpu.memory_space<vmem>>, vector<16x96xf32>
      tpu.vector_store %arg5[%c0_12, %c0_13], %12 {strides = array<i32>} : memref<16x96xf32, #tpu.memory_space<vmem>>, vector<16x96xf32>,
    } else {
    }
    return
  }
  func.func @transform_0(%arg0: i32, %arg1: i32, %arg2: i32) -> (i32, i32) {
    %c0_i32 = arith.constant 0 : i32
    return %arg0, %arg2 : i32, i32
  }
  func.func @transform_1(%arg0: i32, %arg1: i32, %arg2: i32) -> (i32, i32) {
    %c0_i32 = arith.constant 0 : i32
    return %arg2, %arg1 : i32, i32
  }
  func.func @transform_2(%arg0: i32, %arg1: i32, %arg2: i32) -> (i32, i32) {
    %c0_i32 = arith.constant 0 : i32
    return %arg0, %arg1 : i32, i32
  }
}

</mosaic_0001>

<llo_original>
// kernel: tpu_custom_call.1
$region0: #{tpu_custom_call.1}
  #allocation0 [shape = 'u32[]', space=smem, size = 0x4, offset = 0x4, fixed_abs, tag = 'smem constant byte address 0x4 - core index']
  #allocation1 [shape = 'u32[72,128]{1,0:T(1,128)}', space=vmem, size = 0x9000, scoped, tag = 'internal scratch']
  #allocation2 [shape = 'f32[16,96]{1,0:T(8,128)}', space=vmem, size = 0x2000, scoped, tag = 'scratch operand']
  %s0 = inlined_call_operand.hbm [shape: f32[16,32], index: 0, kind: input, shape index: {}]
  %s1 = inlined_call_operand.hbm [shape: f32[32,96], index: 1, kind: input, shape index: {}]
  %s2 = inlined_call_operand.hbm [shape: f32[16,96], index: 2, kind: output, shape index: {}]
  %s3 = sld [smem:[#allocation0]]
  $region34: #{tpu_custom_call.1} parent=0
    _
  %s5 = ssub.s32 1, %s3
  %s6 = scalar_select 0, %s5, %s3
  $region1: #{tpu_custom_call.1} parent=0
    #allocation3 [shape = 'u8[8192]{0}', space=vmem, size = 0x2000, scoped, tag = 'input window, operand 0, single buffered']
    #allocation4 [shape = 's32[1]{0}', space=sflag, size = 0x4, scoped, tag = 'scoped memory for tpu_custom_call.1']
    #allocation5 [shape = 's32[1]{0}', space=sflag, size = 0x4, scoped, tag = 'scoped memory for tpu_custom_call.1']
    #allocation6 [shape = 'u8[16384]{0}', space=vmem, size = 0x4000, scoped, tag = 'input window, operand 1, single buffered']
    #allocation7 [shape = 's32[1]{0}', space=sflag, size = 0x4, scoped, tag = 'scoped memory for tpu_custom_call.1']
    #allocation8 [shape = 'u8[8192]{0}', space=vmem, size = 0x2000, scoped, tag = 'output window, operand 0, single buffered']
    %7 = vsyncpa [#allocation4], 0
    %8 = vsyncpa [#allocation7], 0
    %9 = vsyncpa [#allocation5], 0
    // Predicated region
    $region2: #{tpu_custom_call.1} parent=1 // pred_check
      _
    $region3: #{tpu_custom_call.1} parent=1 // pred_check_branch
      %11 = sbr.rel (0) target = $region5
    $region4: #{tpu_custom_call.1} parent=1 // pred_region
      %13 = vsyncadd [#allocation4], 0
      %s14 = sshll.u32 %s0, 4
      %s15 = int_to_ptr.hbm [resolvable:$true] %s14
      %s16 = sshll.u32 [#allocation3], 4
      %s17 = int_to_ptr.vmem [resolvable:$true] %s16
      %22 = dma.hbm_to_vmem [thread:$0]  %s15, 256, %s17, [#allocation4], 128, 128, 8
    $region5: #{tpu_custom_call.1} parent=1 // pred_fallthru
      _
    // Predicated region
    $region6: #{tpu_custom_call.1} parent=1 // pred_check
      _
    $region7: #{tpu_custom_call.1} parent=1 // pred_check_branch
      %24 = sbr.rel (0) target = $region9
    $region8: #{tpu_custom_call.1} parent=1 // pred_region
      %26 = vsyncadd [#allocation7], 0
      %s27 = sshll.u32 %s1, 4
      %s28 = int_to_ptr.hbm [resolvable:$true] %s27
      %s29 = sshll.u32 [#allocation6], 4
      %s30 = int_to_ptr.vmem [resolvable:$true] %s29
      %35 = dma.hbm_to_vmem [thread:$0]  %s28, 512, %s30, [#allocation7], 128, 128, 8
    $region9: #{tpu_custom_call.1} parent=1 // pred_fallthru
      _
    // Predicated region
    $region10: #{tpu_custom_call.1} parent=1 // pred_check
      _
    $region11: #{tpu_custom_call.1} parent=1 // pred_check_branch
      %37 = sbr.rel (0) target = $region13
    $region12: #{tpu_custom_call.1} parent=1 // pred_region
      %39 = dma.done [#allocation4], 256
    $region13: #{tpu_custom_call.1} parent=1 // pred_fallthru
      _
    // Predicated region
    $region14: #{tpu_custom_call.1} parent=1 // pred_check
      _
    $region15: #{tpu_custom_call.1} parent=1 // pred_check_branch
      %41 = sbr.rel (0) target = $region17
    $region16: #{tpu_custom_call.1} parent=1 // pred_region
      %43 = dma.done [#allocation7], 512
    $region17: #{tpu_custom_call.1} parent=1 // pred_fallthru
      _
    %p44 = scmp.eq.s32.totalorder 0, 0
    // Predicated region
    $region18: #{tpu_custom_call.1} parent=1 // pred_check
      %p45 = pneg %p44
    $region19: #{tpu_custom_call.1} parent=1 // pred_check_branch
      %47 = sbr.rel (%p45) target = $region21
    $region20: #{tpu_custom_call.1} parent=1 // pred_region
      %vm48 = vcmask 785408
      %49 = vst.msk [vmem:[#allocation2] sm:$0xff] %vm48, 0.0
      %50 = vst.msk [vmem:[#allocation2 + $0x8] sm:$0xff] %vm48, 0.0
    $region21: #{tpu_custom_call.1} parent=1 // pred_fallthru
      _
    %v51 = vld [vmem:[#allocation2] sm:$0xff]
    %v52 = vld [vmem:[#allocation2 + $0x8] sm:$0xff]
    %v53 = vld [vmem:[#allocation3] sm:$0xff]
    %v54 = vld [vmem:[#allocation3 + $0x8] sm:$0xff]
    %v55 = vld [vmem:[#allocation6] sm:$0xff]
    %v56 = vld [vmem:[#allocation6 + $0x8] sm:$0xff]
    %v57 = vld [vmem:[#allocation6 + $0x10] sm:$0xff]
    %v58 = vld [vmem:[#allocation6 + $0x18] sm:$0xff]
    %vm59 = vcmask 261120
    %v61 = vsel %vm59, %v53, 0
    %v64 = vsel %vm59, %v54, 0
    %66 = vmatpush.msra.mxu0 0.0
    %67 = vmatpush.msra.mxu0 0.0
    %68 = vmatpush.msra.mxu0 0.0
    %69 = vmatpush.msra.mxu0 0.0
    %70 = vmatpush.msra.mxu0 0.0
    %71 = vmatpush.msra.mxu0 0.0
    %72 = vmatpush.msra.mxu0 0.0
    %73 = vmatpush.msra.mxu0 0.0
    %74 = vmatpush.msra.mxu0 0.0
    %75 = vmatpush.msra.mxu0 0.0
    %76 = vmatpush.msra.mxu0 0.0
    %77 = vmatpush.msra.mxu0 0.0
    %78 = vmatpush.msra.mxu0 %v58
    %79 = vmatpush.msra.mxu0 %v57
    %80 = vmatpush.msra.mxu0 %v56
    %81 = vmatpush.msra.mxu0 %v55
    %82 = vmatmul.f32.gmra.mxu0 %v61
    %v83 = vpop.f32.mrf.mxu0
    %v84 = vadd.f32 0.0, %v83
    %85 = vmatmul.f32.gmra.mxu0 %v64
    %v86 = vpop.f32.mrf.mxu0
    %v87 = vadd.f32 0.0, %v86
    %88 = vdwg.mxu0
    %v89 = vadd.f32 %v51, %v84
    %v90 = vadd.f32 %v52, %v87
    %vm91 = vcmask 785408
    %92 = vst.msk [vmem:[#allocation2] sm:$0xff] %vm91, %v89
    %93 = vst.msk [vmem:[#allocation2 + $0x8] sm:$0xff] %vm91, %v90
    // Predicated region
    $region22: #{tpu_custom_call.1} parent=1 // pred_check
      %p94 = pneg %p44
    $region23: #{tpu_custom_call.1} parent=1 // pred_check_branch
      %96 = sbr.rel (%p94) target = $region25
    $region24: #{tpu_custom_call.1} parent=1 // pred_region
      %v97 = vld [vmem:[#allocation2] sm:$0xff]
      %v98 = vld [vmem:[#allocation2 + $0x8] sm:$0xff]
      %99 = vst.msk [vmem:[#allocation8] sm:$0xff] %vm91, %v97
      %100 = vst.msk [vmem:[#allocation8 + $0x8] sm:$0xff] %vm91, %v98
    $region25: #{tpu_custom_call.1} parent=1 // pred_fallthru
      _
    // Predicated region
    $region26: #{tpu_custom_call.1} parent=1 // pred_check
      _
    $region27: #{tpu_custom_call.1} parent=1 // pred_check_branch
      %102 = sbr.rel (0) target = $region29
    $region28: #{tpu_custom_call.1} parent=1 // pred_region
      %104 = vsyncadd [#allocation5], 0
      %s105 = sshll.u32 [#allocation8], 4
      %s106 = int_to_ptr.vmem [resolvable:$true] %s105
      %s107 = sshll.u32 %s2, 4
      %s108 = int_to_ptr.hbm [resolvable:$true] %s107
      %113 = dma.vmem_to_hbm [thread:$0]  %s106, 256, %s108, [#allocation5], 128, 128, 8
    $region29: #{tpu_custom_call.1} parent=1 // pred_fallthru
      _
    // Predicated region
    $region30: #{tpu_custom_call.1} parent=1 // pred_check
      _
    $region31: #{tpu_custom_call.1} parent=1 // pred_check_branch
      %115 = sbr.rel (0) target = $region33
    $region32: #{tpu_custom_call.1} parent=1 // pred_region
      %117 = dma.done [#allocation5], 256
    $region33: #{tpu_custom_call.1} parent=1 // pred_fallthru
      _
    %118 = vsyncpa [#allocation4], 1
    %119 = vsyncpa [#allocation7], 1
    %120 = vsyncpa [#allocation5], 1

</llo_original>
